<compile_context>
chip_gen: v5e
topology: v5e:2x2
jax: 0.10.0
libtpu: 0.0.40
codegen_flags: <defaults>
</compile_context>

<pallas_src>
import functools

import numpy as np
import jax
import jax.numpy as jnp
from jax.experimental import pallas as pl
from jax.experimental.pallas import tpu as pltpu


# ----------------------------------------------------------------------------
# Fused layer kernel. All operands live in VMEM at once.
# x is (B*S, D) with rows ordered (b*S + s) so each batch is contiguous.
# Output is a single lane-dense (B, D + S*S) slab: [:, :D] = layer output,
# [:, D:] = head-averaged attention flattened row-major over (q, k).
# ----------------------------------------------------------------------------
def _encoder_layer_kernel(x_ref, inw_ref, inb_ref, outw_ref, outb_ref,
                          lnw_ref, lnb_ref, w1_ref, b1_ref, w2_ref, b2_ref,
                          out_ref, *, S, B, H, hd):
    D = H * hd
    x = x_ref[...]                                                   # (B*S, D) f32

    # --- packed QKV in-projection: one MXU matmul (bf16 operands, f32 acc) --
    qkv = (jnp.dot(x.astype(jnp.bfloat16), inw_ref[...],
                   preferred_element_type=jnp.float32)
           + inb_ref[...])                                           # (B*S, 3D) f32

    scale = 1.0 / float(hd) ** 0.5
    q_all = (qkv[:, :D] * scale).astype(jnp.bfloat16)   # fold 1/sqrt(hd) into q
    k_all = qkv[:, D:2 * D].astype(jnp.bfloat16)
    v_all = qkv[:, 2 * D:].astype(jnp.bfloat16)

    # --- attention (H small & static; per-head 2-D/batched matmuls) --------
    attn_acc = jnp.zeros((B, S, S), jnp.float32)
    ctx_heads = []
    for h in range(H):
        lo, hi = h * hd, (h + 1) * hd
        q3 = q_all[:, lo:hi].reshape(B, S, hd)                       # layout-preserving
        k3 = k_all[:, lo:hi].reshape(B, S, hd)
        v3 = v_all[:, lo:hi].reshape(B, S, hd)

        # scores: contract the head dim directly (no k.T / XLU round-trip)
        sc = jnp.einsum('bqd,bkd->bqk', q3, k3,
                        preferred_element_type=jnp.float32)          # (B, S, S) f32
        m = jnp.max(sc, axis=-1, keepdims=True)
        p = jnp.exp(sc - m)
        denom = jnp.sum(p, axis=-1, keepdims=True)
        p = p * pl.reciprocal(denom, approx=True)                    # EUP, not VPU divide
        attn_acc = attn_acc + p

        # PV only for the last query row: only src2[-1] is consumed downstream.
        p_last = p[:, S - 1:S, :].astype(jnp.bfloat16)               # (B, 1, S)
        ctx = jnp.einsum('bqk,bkd->bqd', p_last, v3,
                         preferred_element_type=jnp.float32)         # (B, 1, hd)
        ctx_heads.append(ctx.reshape(B, hd))

    ctx_last = jnp.concatenate(ctx_heads, axis=-1)                   # (B, D)
    src2_last = (jnp.dot(ctx_last.astype(jnp.bfloat16), outw_ref[...],
                         preferred_element_type=jnp.float32) + outb_ref[...])

    # --- residual + LayerNorm(64) + FFN(relu) + residual (all f32) ---------
    src_last = x_ref[pl.ds(S - 1, B, stride=S), :]                   # src[-1], strided read
    add = src_last + src2_last                    # dropout1 identity (p=0)
    mu = jnp.mean(add, axis=-1, keepdims=True)
    var = jnp.mean((add - mu) * (add - mu), axis=-1, keepdims=True)
    xn = (add - mu) * jax.lax.rsqrt(var + 1e-5)
    xn = xn * lnw_ref[...] + lnb_ref[...]                            # norm1 (norm2 unused)

    h1 = (jnp.dot(xn.astype(jnp.bfloat16), w1_ref[...],
                  preferred_element_type=jnp.float32) + b1_ref[...])
    h1 = jnp.maximum(h1, 0.0)                                        # relu
    y = (jnp.dot(h1.astype(jnp.bfloat16), w2_ref[...],
                 preferred_element_type=jnp.float32) + b2_ref[...])
    final = xn + y                                                   # dropout2 identity

    # head-averaged attention, flattened to (B, S*S) lanes via unit-dim slices
    # (avoids a sublane->lane reshape of the (B,S,S) accumulator).
    attn_flat = jnp.concatenate([attn_acc[:, qi, :] for qi in range(S)],
                                axis=-1) * (1.0 / H)                 # (B, S*S)

    out_ref[...] = jnp.concatenate([final, attn_flat], axis=-1)      # (B, D+S*S)


# ----------------------------------------------------------------------------
# Forward pass: one pallas_call, single lane-dense output.
# ----------------------------------------------------------------------------
def transformer_encoder_layer(src, params, nhead):
    S, B, D = src.shape
    assert D == 64, "reference module hard-codes LayerNorm(64)/Linear(64, ff)"
    H = nhead
    hd = D // H

    # b-major rows: batch-contiguous blocks inside the kernel (tiny 4 KB relayout).
    x = jnp.transpose(src, (1, 0, 2)).reshape(B * S, D)

    args = (x,
            params["in_proj_w_t"], params["in_proj_b"],
            params["out_proj_w_t"], params["out_proj_b"],
            params["ln1_w"], params["ln1_b"],
            params["w1_t"], params["b1"],
            params["w2_t"], params["b2"])

    full = lambda shp: pl.BlockSpec(shp, lambda i: (0,) * len(shp))
    kernel = functools.partial(_encoder_layer_kernel, S=S, B=B, H=H, hd=hd)

    packed = pl.pallas_call(
        kernel,
        out_shape=jax.ShapeDtypeStruct((B, D + S * S), jnp.float32),
        grid=(1,),
        in_specs=[full(a.shape) for a in args],
        out_specs=full((B, D + S * S)),
        compiler_params=pltpu.CompilerParams(
            dimension_semantics=("arbitrary",)),
    )(*args)

    out = packed[:, :D]
    attn = packed[:, D:].reshape(B, S, S)
    return out, attn


# ----------------------------------------------------------------------------
# Params: weights pre-transposed ((Din, Dout)) and pre-cast to bf16 (MXU-native,
# half the weight DMA bytes, no in-kernel weight casts); biases / LN stay f32.
# ----------------------------------------------------------------------------
def init_params(key, d_model, dim_feedforward):
    D, FF = d_model, dim_feedforward
    ks = jax.random.split(key, 8)
    in_proj_w = jax.random.normal(ks[0], (3 * D, D), jnp.float32) * 0.05   # torch (3D, D)
    out_proj_w = jax.random.normal(ks[1], (D, D), jnp.float32) * 0.05      # torch (D, D)
    w1 = jax.random.normal(ks[2], (FF, 64), jnp.float32) * 0.05            # torch Linear(64, FF)
    w2 = jax.random.normal(ks[3], (64, FF), jnp.float32) * 0.05            # torch Linear(FF, 64)
    return {
        "in_proj_w_t": in_proj_w.T.astype(jnp.bfloat16),    # (D, 3D)
        "in_proj_b": jax.random.normal(ks[4], (1, 3 * D), jnp.float32) * 0.02,
        "out_proj_w_t": out_proj_w.T.astype(jnp.bfloat16),  # (D, D)
        "out_proj_b": jax.random.normal(ks[5], (1, D), jnp.float32) * 0.02,
        "ln1_w": jnp.ones((1, 64), jnp.float32),
        "ln1_b": jnp.zeros((1, 64), jnp.float32),
        "w1_t": w1.T.astype(jnp.bfloat16),                  # (64, FF)
        "b1": jax.random.normal(ks[6], (1, FF), jnp.float32) * 0.02,
        "w2_t": w2.T.astype(jnp.bfloat16),                  # (FF, 64)
        "b2": jax.random.normal(ks[7], (1, 64), jnp.float32) * 0.02,
    }


# ----------------------------------------------------------------------------
# Pure-JAX f32 reference (same semantics) for a correctness cross-check.
# ----------------------------------------------------------------------------
def _reference(src, params, nhead):
    S, B, D = src.shape
    H, hd = nhead, D // nhead
    f32 = jnp.float32
    x = src.reshape(S * B, D)
    qkv = x @ params["in_proj_w_t"].astype(f32) + params["in_proj_b"][0]
    q, k, v = jnp.split(qkv, 3, axis=-1)
    to_h = lambda t: t.reshape(S, B, H, hd).transpose(1, 2, 0, 3)   # (B,H,S,hd)
    qh, kh, vh = to_h(q), to_h(k), to_h(v)
    s = jnp.einsum('bhqd,bhkd->bhqk', qh, kh) / jnp.sqrt(float(hd))
    p = jax.nn.softmax(s, axis=-1)
    attn = p.mean(axis=1)                                           # (B,S,S)
    ctx = jnp.einsum('bhqk,bhkd->bhqd', p, vh)
    ctx = ctx.transpose(2, 0, 1, 3).reshape(S, B, D)
    src2 = ctx @ params["out_proj_w_t"].astype(f32) + params["out_proj_b"][0]
    add = src[-1] + src2[-1]
    mu = add.mean(-1, keepdims=True)
    var = ((add - mu) ** 2).mean(-1, keepdims=True)
    xn = (add - mu) / jnp.sqrt(var + 1e-5) * params["ln1_w"][0] + params["ln1_b"][0]
    h1 = jnp.maximum(xn @ params["w1_t"].astype(f32) + params["b1"][0], 0.0)
    y = h1 @ params["w2_t"].astype(f32) + params["b2"][0]
    return xn + y, attn


if __name__ == "__main__":
    S, B, D, H, FF = 8, 2, 64, 4, 128   # seq, batch, d_model, nhead, dim_feedforward

    key = jax.random.PRNGKey(0)
    k_src, k_par = jax.random.split(key)
    src = jax.random.normal(k_src, (S, B, D), jnp.float32)
    params = init_params(k_par, D, FF)

    fwd = jax.jit(functools.partial(transformer_encoder_layer, nhead=H))
    src_add_2, attn = fwd(src, params)
    jax.block_until_ready((src_add_2, attn))

    assert src_add_2.shape == (B, 64) and attn.shape == (B, S, S)
    assert bool(jnp.all(jnp.isfinite(src_add_2))) and bool(jnp.all(jnp.isfinite(attn)))

    ref_out, ref_attn = _reference(src, params, H)
    np.testing.assert_allclose(np.asarray(src_add_2), np.asarray(ref_out),
                               rtol=2e-2, atol=2e-2)
    np.testing.assert_allclose(np.asarray(attn), np.asarray(ref_attn),
                               rtol=2e-2, atol=2e-2)
    print("KERNEL_OK")
</pallas_src>

<mosaic_0001>
module attributes {stable_mosaic.version = 11 : i64} {
  func.func @_encoder_layer_kernel(%arg0: i32, %arg1: memref<16x64xf32, #tpu.memory_space<vmem>>, %arg2: memref<64x192xbf16, #tpu.memory_space<vmem>>, %arg3: memref<1x192xf32, #tpu.memory_space<vmem>>, %arg4: memref<64x64xbf16, #tpu.memory_space<vmem>>, %arg5: memref<1x64xf32, #tpu.memory_space<vmem>>, %arg6: memref<1x64xf32, #tpu.memory_space<vmem>>, %arg7: memref<1x64xf32, #tpu.memory_space<vmem>>, %arg8: memref<64x128xbf16, #tpu.memory_space<vmem>>, %arg9: memref<1x128xf32, #tpu.memory_space<vmem>>, %arg10: memref<128x64xbf16, #tpu.memory_space<vmem>>, %arg11: memref<1x64xf32, #tpu.memory_space<vmem>>, %arg12: memref<2x128xf32, #tpu.memory_space<vmem>>) attributes {dimension_semantics = [#tpu.dimension_semantics<arbitrary>], iteration_bounds = array<i64: 1>, scalar_prefetch = 0 : i64, scratch_operands = 0 : i64, tpu.core_type = #tpu.core_type<tc>, window_params = [{pipeline_mode = #tpu.pipeline_mode<synchronous>, transform_indices = @transform_0, window_bounds = array<i64: 16, 64>}, {pipeline_mode = #tpu.pipeline_mode<synchronous>, transform_indices = @transform_1, window_bounds = array<i64: 64, 192>}, {pipeline_mode = #tpu.pipeline_mode<synchronous>, transform_indices = @transform_2, window_bounds = array<i64: 1, 192>}, {pipeline_mode = #tpu.pipeline_mode<synchronous>, transform_indices = @transform_3, window_bounds = array<i64: 64, 64>}, {pipeline_mode = #tpu.pipeline_mode<synchronous>, transform_indices = @transform_4, window_bounds = array<i64: 1, 64>}, {pipeline_mode = #tpu.pipeline_mode<synchronous>, transform_indices = @transform_5, window_bounds = array<i64: 1, 64>}, {pipeline_mode = #tpu.pipeline_mode<synchronous>, transform_indices = @transform_6, window_bounds = array<i64: 1, 64>}, {pipeline_mode = #tpu.pipeline_mode<synchronous>, transform_indices = @transform_7, window_bounds = array<i64: 64, 128>}, {pipeline_mode = #tpu.pipeline_mode<synchronous>, transform_indices = @transform_8, window_bounds = array<i64: 1, 128>}, {pipeline_mode = #tpu.pipeline_mode<synchronous>, transform_indices = @transform_9, window_bounds = array<i64: 128, 64>}, {pipeline_mode = #tpu.pipeline_mode<synchronous>, transform_indices = @transform_10, window_bounds = array<i64: 1, 64>}, {pipeline_mode = #tpu.pipeline_mode<synchronous>, transform_indices = @transform_11, window_bounds = array<i64: 2, 128>}]} {
    %c0 = arith.constant 0 : index
    %c0_0 = arith.constant 0 : index
    %0 = vector.load %arg1[%c0, %c0_0] : memref<16x64xf32, #tpu.memory_space<vmem>>, vector<16x64xf32>
    %1 = arith.truncf %0 : vector<16x64xf32> to vector<16x64xbf16>
    %c0_1 = arith.constant 0 : index
    %c0_2 = arith.constant 0 : index
    %2 = vector.load %arg2[%c0_1, %c0_2] : memref<64x192xbf16, #tpu.memory_space<vmem>>, vector<64x192xbf16>
    %cst = arith.constant dense<0.000000e+00> : vector<16x192xf32>
    %3 = tpu.matmul %1, %2, %cst {dimension_numbers = #tpu.dot_dimension_numbers<[1], [0], [0], [1], [0, 0, 1, 1], [], []>} : vector<16x64xbf16>, vector<64x192xbf16>, vector<16x192xf32> -> vector<16x192xf32>
    %c0_3 = arith.constant 0 : index
    %c0_4 = arith.constant 0 : index
    %4 = vector.load %arg3[%c0_3, %c0_4] : memref<1x192xf32, #tpu.memory_space<vmem>>, vector<1x192xf32>
    %5 = vector.broadcast %4 : vector<1x192xf32> to vector<16x192xf32>
    %6 = arith.addf %3, %5 : vector<16x192xf32>
    %7 = vector.extract_strided_slice %6 {offsets = [0, 0], sizes = [16, 64], strides = [1, 1]} : vector<16x192xf32> to vector<16x64xf32>
    %cst_5 = arith.constant 2.500000e-01 : f32
    %8 = vector.broadcast %cst_5 : f32 to vector<16x64xf32>
    %9 = arith.mulf %7, %8 : vector<16x64xf32>
    %10 = arith.truncf %9 : vector<16x64xf32> to vector<16x64xbf16>
    %11 = vector.extract_strided_slice %6 {offsets = [0, 64], sizes = [16, 64], strides = [1, 1]} : vector<16x192xf32> to vector<16x64xf32>
    %12 = arith.truncf %11 : vector<16x64xf32> to vector<16x64xbf16>
    %13 = vector.extract_strided_slice %6 {offsets = [0, 128], sizes = [16, 64], strides = [1, 1]} : vector<16x192xf32> to vector<16x64xf32>
    %14 = arith.truncf %13 : vector<16x64xf32> to vector<16x64xbf16>
    %cst_6 = arith.constant 0.000000e+00 : f32
    %15 = vector.broadcast %cst_6 : f32 to vector<2x8x8xf32>
    %16 = vector.extract_strided_slice %10 {offsets = [0, 0], sizes = [16, 16], strides = [1, 1]} : vector<16x64xbf16> to vector<16x16xbf16>
    %17 = vector.shape_cast %16 : vector<16x16xbf16> to vector<2x8x16xbf16>
    %18 = vector.extract_strided_slice %12 {offsets = [0, 0], sizes = [16, 16], strides = [1, 1]} : vector<16x64xbf16> to vector<16x16xbf16>
    %19 = vector.shape_cast %18 : vector<16x16xbf16> to vector<2x8x16xbf16>
    %20 = vector.extract_strided_slice %14 {offsets = [0, 0], sizes = [16, 16], strides = [1, 1]} : vector<16x64xbf16> to vector<16x16xbf16>
    %21 = vector.shape_cast %20 : vector<16x16xbf16> to vector<2x8x16xbf16>
    "tpu.trace_start"() <{level = 10 : i32, message = "bqd,bkd->bqk"}> : () -> ()
    %cst_7 = arith.constant dense<0.000000e+00> : vector<2x8x8xf32>
    %22 = tpu.matmul %17, %19, %cst_7 {dimension_numbers = #tpu.dot_dimension_numbers<[2], [2], [1], [1], [0, 0, 0, 1, 1, 1], [0], [0]>} : vector<2x8x16xbf16>, vector<2x8x16xbf16>, vector<2x8x8xf32> -> vector<2x8x8xf32>
    "tpu.trace_stop"() : () -> ()
    %cst_8 = arith.constant dense<0xFF800000> : vector<2x8xf32>
    %23 = vector.multi_reduction <maximumf>, %22, %cst_8 [2] : vector<2x8x8xf32> to vector<2x8xf32>
    %24 = vector.shape_cast %23 : vector<2x8xf32> to vector<2x8x1xf32>
    %25 = vector.broadcast %24 : vector<2x8x1xf32> to vector<2x8x8xf32>
    %26 = arith.subf %22, %25 : vector<2x8x8xf32>
    %27 = math.exp %26 : vector<2x8x8xf32>
    %cst_9 = arith.constant dense<0.000000e+00> : vector<2x8xf32>
    %28 = vector.multi_reduction <add>, %27, %cst_9 [2] : vector<2x8x8xf32> to vector<2x8xf32>
    %29 = vector.shape_cast %28 : vector<2x8xf32> to vector<2x8x1xf32>
    %30 = tpu.reciprocal %29 {approx = true} : vector<2x8x1xf32> -> vector<2x8x1xf32>
    %31 = vector.broadcast %30 : vector<2x8x1xf32> to vector<2x8x8xf32>
    %32 = arith.mulf %27, %31 : vector<2x8x8xf32>
    %33 = arith.addf %15, %32 : vector<2x8x8xf32>
    %34 = vector.extract_strided_slice %32 {offsets = [0, 7, 0], sizes = [2, 1, 8], strides = [1, 1, 1]} : vector<2x8x8xf32> to vector<2x1x8xf32>
    %35 = arith.truncf %34 : vector<2x1x8xf32> to vector<2x1x8xbf16>
    "tpu.trace_start"() <{level = 10 : i32, message = "bqk,bkd->bqd"}> : () -> ()
    %cst_10 = arith.constant dense<0.000000e+00> : vector<2x1x16xf32>
    %36 = tpu.matmul %35, %21, %cst_10 {dimension_numbers = #tpu.dot_dimension_numbers<[2], [1], [1], [2], [0, 0, 0, 1, 1, 2], [0], [0]>} : vector<2x1x8xbf16>, vector<2x8x16xbf16>, vector<2x1x16xf32> -> vector<2x1x16xf32>
    "tpu.trace_stop"() : () -> ()
    %37 = vector.shape_cast %36 : vector<2x1x16xf32> to vector<2x16xf32>
    %38 = vector.extract_strided_slice %10 {offsets = [0, 16], sizes = [16, 16], strides = [1, 1]} : vector<16x64xbf16> to vector<16x16xbf16>
    %39 = vector.shape_cast %38 : vector<16x16xbf16> to vector<2x8x16xbf16>
    %40 = vector.extract_strided_slice %12 {offsets = [0, 16], sizes = [16, 16], strides = [1, 1]} : vector<16x64xbf16> to vector<16x16xbf16>
    %41 = vector.shape_cast %40 : vector<16x16xbf16> to vector<2x8x16xbf16>
    %42 = vector.extract_strided_slice %14 {offsets = [0, 16], sizes = [16, 16], strides = [1, 1]} : vector<16x64xbf16> to vector<16x16xbf16>
    %43 = vector.shape_cast %42 : vector<16x16xbf16> to vector<2x8x16xbf16>
    "tpu.trace_start"() <{level = 10 : i32, message = "bqd,bkd->bqk"}> : () -> ()
    %cst_11 = arith.constant dense<0.000000e+00> : vector<2x8x8xf32>
    %44 = tpu.matmul %39, %41, %cst_11 {dimension_numbers = #tpu.dot_dimension_numbers<[2], [2], [1], [1], [0, 0, 0, 1, 1, 1], [0], [0]>} : vector<2x8x16xbf16>, vector<2x8x16xbf16>, vector<2x8x8xf32> -> vector<2x8x8xf32>
    "tpu.trace_stop"() : () -> ()
    %cst_12 = arith.constant dense<0xFF800000> : vector<2x8xf32>
    %45 = vector.multi_reduction <maximumf>, %44, %cst_12 [2] : vector<2x8x8xf32> to vector<2x8xf32>
    %46 = vector.shape_cast %45 : vector<2x8xf32> to vector<2x8x1xf32>
    %47 = vector.broadcast %46 : vector<2x8x1xf32> to vector<2x8x8xf32>
    %48 = arith.subf %44, %47 : vector<2x8x8xf32>
    %49 = math.exp %48 : vector<2x8x8xf32>
    %cst_13 = arith.constant dense<0.000000e+00> : vector<2x8xf32>
    %50 = vector.multi_reduction <add>, %49, %cst_13 [2] : vector<2x8x8xf32> to vector<2x8xf32>
    %51 = vector.shape_cast %50 : vector<2x8xf32> to vector<2x8x1xf32>
    %52 = tpu.reciprocal %51 {approx = true} : vector<2x8x1xf32> -> vector<2x8x1xf32>
    %53 = vector.broadcast %52 : vector<2x8x1xf32> to vector<2x8x8xf32>
    %54 = arith.mulf %49, %53 : vector<2x8x8xf32>
    %55 = arith.addf %33, %54 : vector<2x8x8xf32>
    %56 = vector.extract_strided_slice %54 {offsets = [0, 7, 0], sizes = [2, 1, 8], strides = [1, 1, 1]} : vector<2x8x8xf32> to vector<2x1x8xf32>
    %57 = arith.truncf %56 : vector<2x1x8xf32> to vector<2x1x8xbf16>
    "tpu.trace_start"() <{level = 10 : i32, message = "bqk,bkd->bqd"}> : () -> ()
    %cst_14 = arith.constant dense<0.000000e+00> : vector<2x1x16xf32>
    %58 = tpu.matmul %57, %43, %cst_14 {dimension_numbers = #tpu.dot_dimension_numbers<[2], [1], [1], [2], [0, 0, 0, 1, 1, 2], [0], [0]>} : vector<2x1x8xbf16>, vector<2x8x16xbf16>, vector<2x1x16xf32> -> vector<2x1x16xf32>
    "tpu.trace_stop"() : () -> ()
    %59 = vector.shape_cast %58 : vector<2x1x16xf32> to vector<2x16xf32>
    %60 = vector.extract_strided_slice %10 {offsets = [0, 32], sizes = [16, 16], strides = [1, 1]} : vector<16x64xbf16> to vector<16x16xbf16>
    %61 = vector.shape_cast %60 : vector<16x16xbf16> to vector<2x8x16xbf16>
    %62 = vector.extract_strided_slice %12 {offsets = [0, 32], sizes = [16, 16], strides = [1, 1]} : vector<16x64xbf16> to vector<16x16xbf16>
    %63 = vector.shape_cast %62 : vector<16x16xbf16> to vector<2x8x16xbf16>
    %64 = vector.extract_strided_slice %14 {offsets = [0, 32], sizes = [16, 16], strides = [1, 1]} : vector<16x64xbf16> to vector<16x16xbf16>
    %65 = vector.shape_cast %64 : vector<16x16xbf16> to vector<2x8x16xbf16>
    "tpu.trace_start"() <{level = 10 : i32, message = "bqd,bkd->bqk"}> : () -> ()
    %cst_15 = arith.constant dense<0.000000e+00> : vector<2x8x8xf32>
    %66 = tpu.matmul %61, %63, %cst_15 {dimension_numbers = #tpu.dot_dimension_numbers<[2], [2], [1], [1], [0, 0, 0, 1, 1, 1], [0], [0]>} : vector<2x8x16xbf16>, vector<2x8x16xbf16>, vector<2x8x8xf32> -> vector<2x8x8xf32>
    "tpu.trace_stop"() : () -> ()
    %cst_16 = arith.constant dense<0xFF800000> : vector<2x8xf32>
    %67 = vector.multi_reduction <maximumf>, %66, %cst_16 [2] : vector<2x8x8xf32> to vector<2x8xf32>
    %68 = vector.shape_cast %67 : vector<2x8xf32> to vector<2x8x1xf32>
    %69 = vector.broadcast %68 : vector<2x8x1xf32> to vector<2x8x8xf32>
    %70 = arith.subf %66, %69 : vector<2x8x8xf32>
    %71 = math.exp %70 : vector<2x8x8xf32>
    %cst_17 = arith.constant dense<0.000000e+00> : vector<2x8xf32>
    %72 = vector.multi_reduction <add>, %71, %cst_17 [2] : vector<2x8x8xf32> to vector<2x8xf32>
    %73 = vector.shape_cast %72 : vector<2x8xf32> to vector<2x8x1xf32>
    %74 = tpu.reciprocal %73 {approx = true} : vector<2x8x1xf32> -> vector<2x8x1xf32>
    %75 = vector.broadcast %74 : vector<2x8x1xf32> to vector<2x8x8xf32>
    %76 = arith.mulf %71, %75 : vector<2x8x8xf32>
    %77 = arith.addf %55, %76 : vector<2x8x8xf32>
    %78 = vector.extract_strided_slice %76 {offsets = [0, 7, 0], sizes = [2, 1, 8], strides = [1, 1, 1]} : vector<2x8x8xf32> to vector<2x1x8xf32>
    %79 = arith.truncf %78 : vector<2x1x8xf32> to vector<2x1x8xbf16>
    "tpu.trace_start"() <{level = 10 : i32, message = "bqk,bkd->bqd"}> : () -> ()
    %cst_18 = arith.constant dense<0.000000e+00> : vector<2x1x16xf32>
    %80 = tpu.matmul %79, %65, %cst_18 {dimension_numbers = #tpu.dot_dimension_numbers<[2], [1], [1], [2], [0, 0, 0, 1, 1, 2], [0], [0]>} : vector<2x1x8xbf16>, vector<2x8x16xbf16>, vector<2x1x16xf32> -> vector<2x1x16xf32>
    "tpu.trace_stop"() : () -> ()
    %81 = vector.shape_cast %80 : vector<2x1x16xf32> to vector<2x16xf32>
    %82 = vector.extract_strided_slice %10 {offsets = [0, 48], sizes = [16, 16], strides = [1, 1]} : vector<16x64xbf16> to vector<16x16xbf16>
    %83 = vector.shape_cast %82 : vector<16x16xbf16> to vector<2x8x16xbf16>
    %84 = vector.extract_strided_slice %12 {offsets = [0, 48], sizes = [16, 16], strides = [1, 1]} : vector<16x64xbf16> to vector<16x16xbf16>
    %85 = vector.shape_cast %84 : vector<16x16xbf16> to vector<2x8x16xbf16>
    %86 = vector.extract_strided_slice %14 {offsets = [0, 48], sizes = [16, 16], strides = [1, 1]} : vector<16x64xbf16> to vector<16x16xbf16>
    %87 = vector.shape_cast %86 : vector<16x16xbf16> to vector<2x8x16xbf16>
    "tpu.trace_start"() <{level = 10 : i32, message = "bqd,bkd->bqk"}> : () -> ()
    %cst_19 = arith.constant dense<0.000000e+00> : vector<2x8x8xf32>
    %88 = tpu.matmul %83, %85, %cst_19 {dimension_numbers = #tpu.dot_dimension_numbers<[2], [2], [1], [1], [0, 0, 0, 1, 1, 1], [0], [0]>} : vector<2x8x16xbf16>, vector<2x8x16xbf16>, vector<2x8x8xf32> -> vector<2x8x8xf32>
    "tpu.trace_stop"() : () -> ()
    %cst_20 = arith.constant dense<0xFF800000> : vector<2x8xf32>
    %89 = vector.multi_reduction <maximumf>, %88, %cst_20 [2] : vector<2x8x8xf32> to vector<2x8xf32>
    %90 = vector.shape_cast %89 : vector<2x8xf32> to vector<2x8x1xf32>
    %91 = vector.broadcast %90 : vector<2x8x1xf32> to vector<2x8x8xf32>
    %92 = arith.subf %88, %91 : vector<2x8x8xf32>
    %93 = math.exp %92 : vector<2x8x8xf32>
    %cst_21 = arith.constant dense<0.000000e+00> : vector<2x8xf32>
    %94 = vector.multi_reduction <add>, %93, %cst_21 [2] : vector<2x8x8xf32> to vector<2x8xf32>
    %95 = vector.shape_cast %94 : vector<2x8xf32> to vector<2x8x1xf32>
    %96 = tpu.reciprocal %95 {approx = true} : vector<2x8x1xf32> -> vector<2x8x1xf32>
    %97 = vector.broadcast %96 : vector<2x8x1xf32> to vector<2x8x8xf32>
    %98 = arith.mulf %93, %97 : vector<2x8x8xf32>
    %99 = arith.addf %77, %98 : vector<2x8x8xf32>
    %100 = vector.extract_strided_slice %98 {offsets = [0, 7, 0], sizes = [2, 1, 8], strides = [1, 1, 1]} : vector<2x8x8xf32> to vector<2x1x8xf32>
    %101 = arith.truncf %100 : vector<2x1x8xf32> to vector<2x1x8xbf16>
    "tpu.trace_start"() <{level = 10 : i32, message = "bqk,bkd->bqd"}> : () -> ()
    %cst_22 = arith.constant dense<0.000000e+00> : vector<2x1x16xf32>
    %102 = tpu.matmul %101, %87, %cst_22 {dimension_numbers = #tpu.dot_dimension_numbers<[2], [1], [1], [2], [0, 0, 0, 1, 1, 2], [0], [0]>} : vector<2x1x8xbf16>, vector<2x8x16xbf16>, vector<2x1x16xf32> -> vector<2x1x16xf32>
    "tpu.trace_stop"() : () -> ()
    %103 = vector.shape_cast %102 : vector<2x1x16xf32> to vector<2x16xf32>
    %104 = tpu.concatenate %37, %59, %81, %103 in 1 : vector<2x16xf32>, vector<2x16xf32>, vector<2x16xf32>, vector<2x16xf32> -> vector<2x64xf32>
    %105 = arith.truncf %104 : vector<2x64xf32> to vector<2x64xbf16>
    %c0_23 = arith.constant 0 : index
    %c0_24 = arith.constant 0 : index
    %106 = vector.load %arg4[%c0_23, %c0_24] : memref<64x64xbf16, #tpu.memory_space<vmem>>, vector<64x64xbf16>
    %cst_25 = arith.constant dense<0.000000e+00> : vector<2x64xf32>
    %107 = tpu.matmul %105, %106, %cst_25 {dimension_numbers = #tpu.dot_dimension_numbers<[1], [0], [0], [1], [0, 0, 1, 1], [], []>} : vector<2x64xbf16>, vector<64x64xbf16>, vector<2x64xf32> -> vector<2x64xf32>
    %c0_26 = arith.constant 0 : index
    %c0_27 = arith.constant 0 : index
    %108 = vector.load %arg5[%c0_26, %c0_27] : memref<1x64xf32, #tpu.memory_space<vmem>>, vector<1x64xf32>
    %109 = vector.broadcast %108 : vector<1x64xf32> to vector<2x64xf32>
    %110 = arith.addf %107, %109 : vector<2x64xf32>
    %c7 = arith.constant 7 : index
    %c0_28 = arith.constant 0 : index
    %111 = tpu.strided_load %arg1[%c7, %c0_28] {strides = array<i32: 8, 1>} : memref<16x64xf32, #tpu.memory_space<vmem>>, vector<2x64xf32>
    %112 = arith.addf %111, %110 : vector<2x64xf32>
    %cst_29 = arith.constant dense<0.000000e+00> : vector<2xf32>
    %113 = vector.multi_reduction <add>, %112, %cst_29 [1] : vector<2x64xf32> to vector<2xf32>
    %114 = vector.shape_cast %113 : vector<2xf32> to vector<2x1xf32>
    %cst_30 = arith.constant 6.400000e+01 : f32
    %115 = vector.broadcast %cst_30 : f32 to vector<2x1xf32>
    %116 = arith.divf %114, %115 : vector<2x1xf32>
    %117 = vector.broadcast %116 : vector<2x1xf32> to vector<2x64xf32>
    %118 = arith.subf %112, %117 : vector<2x64xf32>
    %119 = vector.broadcast %116 : vector<2x1xf32> to vector<2x64xf32>
    %120 = arith.subf %112, %119 : vector<2x64xf32>
    %121 = arith.mulf %118, %120 : vector<2x64xf32>
    %cst_31 = arith.constant dense<0.000000e+00> : vector<2xf32>
    %122 = vector.multi_reduction <add>, %121, %cst_31 [1] : vector<2x64xf32> to vector<2xf32>
    %123 = vector.shape_cast %122 : vector<2xf32> to vector<2x1xf32>
    %cst_32 = arith.constant 6.400000e+01 : f32
    %124 = vector.broadcast %cst_32 : f32 to vector<2x1xf32>
    %125 = arith.divf %123, %124 : vector<2x1xf32>
    %126 = vector.broadcast %116 : vector<2x1xf32> to vector<2x64xf32>
    %127 = arith.subf %112, %126 : vector<2x64xf32>
    %cst_33 = arith.constant 9.99999974E-6 : f32
    %128 = vector.broadcast %cst_33 : f32 to vector<2x1xf32>
    %129 = arith.addf %125, %128 : vector<2x1xf32>
    %130 = math.rsqrt %129 : vector<2x1xf32>
    %131 = vector.broadcast %130 : vector<2x1xf32> to vector<2x64xf32>
    %132 = arith.mulf %127, %131 : vector<2x64xf32>
    %c0_34 = arith.constant 0 : index
    %c0_35 = arith.constant 0 : index
    %133 = vector.load %arg6[%c0_34, %c0_35] : memref<1x64xf32, #tpu.memory_space<vmem>>, vector<1x64xf32>
    %134 = vector.broadcast %133 : vector<1x64xf32> to vector<2x64xf32>
    %135 = arith.mulf %132, %134 : vector<2x64xf32>
    %c0_36 = arith.constant 0 : index
    %c0_37 = arith.constant 0 : index
    %136 = vector.load %arg7[%c0_36, %c0_37] : memref<1x64xf32, #tpu.memory_space<vmem>>, vector<1x64xf32>
    %137 = vector.broadcast %136 : vector<1x64xf32> to vector<2x64xf32>
    %138 = arith.addf %135, %137 : vector<2x64xf32>
    %139 = arith.truncf %138 : vector<2x64xf32> to vector<2x64xbf16>
    %c0_38 = arith.constant 0 : index
    %c0_39 = arith.constant 0 : index
    %140 = vector.load %arg8[%c0_38, %c0_39] : memref<64x128xbf16, #tpu.memory_space<vmem>>, vector<64x128xbf16>
    %cst_40 = arith.constant dense<0.000000e+00> : vector<2x128xf32>
    %141 = tpu.matmul %139, %140, %cst_40 {dimension_numbers = #tpu.dot_dimension_numbers<[1], [0], [0], [1], [0, 0, 1, 1], [], []>} : vector<2x64xbf16>, vector<64x128xbf16>, vector<2x128xf32> -> vector<2x128xf32>
    %c0_41 = arith.constant 0 : index
    %c0_42 = arith.constant 0 : index
    %142 = vector.load %arg9[%c0_41, %c0_42] : memref<1x128xf32, #tpu.memory_space<vmem>>, vector<1x128xf32>
    %143 = vector.broadcast %142 : vector<1x128xf32> to vector<2x128xf32>
    %144 = arith.addf %141, %143 : vector<2x128xf32>
    %cst_43 = arith.constant 0.000000e+00 : f32
    %145 = vector.broadcast %cst_43 : f32 to vector<2x128xf32>
    %146 = arith.maximumf %144, %145 : vector<2x128xf32>
    %147 = arith.truncf %146 : vector<2x128xf32> to vector<2x128xbf16>
    %c0_44 = arith.constant 0 : index
    %c0_45 = arith.constant 0 : index
    %148 = vector.load %arg10[%c0_44, %c0_45] : memref<128x64xbf16, #tpu.memory_space<vmem>>, vector<128x64xbf16>
    %cst_46 = arith.constant dense<0.000000e+00> : vector<2x64xf32>
    %149 = tpu.matmul %147, %148, %cst_46 {dimension_numbers = #tpu.dot_dimension_numbers<[1], [0], [0], [1], [0, 0, 1, 1], [], []>} : vector<2x128xbf16>, vector<128x64xbf16>, vector<2x64xf32> -> vector<2x64xf32>
    %c0_47 = arith.constant 0 : index
    %c0_48 = arith.constant 0 : index
    %150 = vector.load %arg11[%c0_47, %c0_48] : memref<1x64xf32, #tpu.memory_space<vmem>>, vector<1x64xf32>
    %151 = vector.broadcast %150 : vector<1x64xf32> to vector<2x64xf32>
    %152 = arith.addf %149, %151 : vector<2x64xf32>
    %153 = arith.addf %138, %152 : vector<2x64xf32>
    %154 = vector.extract_strided_slice %99 {offsets = [0, 0, 0], sizes = [2, 1, 8], strides = [1, 1, 1]} : vector<2x8x8xf32> to vector<2x1x8xf32>
    %155 = vector.shape_cast %154 : vector<2x1x8xf32> to vector<2x8xf32>
    %156 = vector.extract_strided_slice %99 {offsets = [0, 1, 0], sizes = [2, 1, 8], strides = [1, 1, 1]} : vector<2x8x8xf32> to vector<2x1x8xf32>
    %157 = vector.shape_cast %156 : vector<2x1x8xf32> to vector<2x8xf32>
    %158 = vector.extract_strided_slice %99 {offsets = [0, 2, 0], sizes = [2, 1, 8], strides = [1, 1, 1]} : vector<2x8x8xf32> to vector<2x1x8xf32>
    %159 = vector.shape_cast %158 : vector<2x1x8xf32> to vector<2x8xf32>
    %160 = vector.extract_strided_slice %99 {offsets = [0, 3, 0], sizes = [2, 1, 8], strides = [1, 1, 1]} : vector<2x8x8xf32> to vector<2x1x8xf32>
    %161 = vector.shape_cast %160 : vector<2x1x8xf32> to vector<2x8xf32>
    %162 = vector.extract_strided_slice %99 {offsets = [0, 4, 0], sizes = [2, 1, 8], strides = [1, 1, 1]} : vector<2x8x8xf32> to vector<2x1x8xf32>
    %163 = vector.shape_cast %162 : vector<2x1x8xf32> to vector<2x8xf32>
    %164 = vector.extract_strided_slice %99 {offsets = [0, 5, 0], sizes = [2, 1, 8], strides = [1, 1, 1]} : vector<2x8x8xf32> to vector<2x1x8xf32>
    %165 = vector.shape_cast %164 : vector<2x1x8xf32> to vector<2x8xf32>
    %166 = vector.extract_strided_slice %99 {offsets = [0, 6, 0], sizes = [2, 1, 8], strides = [1, 1, 1]} : vector<2x8x8xf32> to vector<2x1x8xf32>
    %167 = vector.shape_cast %166 : vector<2x1x8xf32> to vector<2x8xf32>
    %168 = vector.extract_strided_slice %99 {offsets = [0, 7, 0], sizes = [2, 1, 8], strides = [1, 1, 1]} : vector<2x8x8xf32> to vector<2x1x8xf32>
    %169 = vector.shape_cast %168 : vector<2x1x8xf32> to vector<2x8xf32>
    %170 = tpu.concatenate %155, %157, %159, %161, %163, %165, %167, %169 in 1 : vector<2x8xf32>, vector<2x8xf32>, vector<2x8xf32>, vector<2x8xf32>, vector<2x8xf32>, vector<2x8xf32>, vector<2x8xf32>, vector<2x8xf32> -> vector<2x64xf32>
    %cst_49 = arith.constant 2.500000e-01 : f32
    %171 = vector.broadcast %cst_49 : f32 to vector<2x64xf32>
    %172 = arith.mulf %170, %171 : vector<2x64xf32>
    %173 = tpu.concatenate %153, %172 in 1 : vector<2x64xf32>, vector<2x64xf32> -> vector<2x128xf32>
    %c0_50 = arith.constant 0 : index
    %c0_51 = arith.constant 0 : index
    %174 = vector.load %arg12[%c0_50, %c0_51] : memref<2x128xf32, #tpu.memory_space<vmem>>, vector<2x128xf32>
    tpu.vector_store %arg12[%c0_50, %c0_51], %173 {strides = array<i32>} : memref<2x128xf32, #tpu.memory_space<vmem>>, vector<2x128xf32>,
    return
  }
  func.func @transform_0(%arg0: i32) -> (i32, i32) {
    %c0_i32 = arith.constant 0 : i32
    %c0_i32_0 = arith.constant 0 : i32
    %c0_i32_1 = arith.constant 0 : i32
    return %c0_i32, %c0_i32_0 : i32, i32
  }
  func.func @transform_1(%arg0: i32) -> (i32, i32) {
    %c0_i32 = arith.constant 0 : i32
    %c0_i32_0 = arith.constant 0 : i32
    %c0_i32_1 = arith.constant 0 : i32
    return %c0_i32, %c0_i32_0 : i32, i32
  }
  func.func @transform_2(%arg0: i32) -> (i32, i32) {
    %c0_i32 = arith.constant 0 : i32
    %c0_i32_0 = arith.constant 0 : i32
    %c0_i32_1 = arith.constant 0 : i32
    return %c0_i32, %c0_i32_0 : i32, i32
  }
  func.func @transform_3(%arg0: i32) -> (i32, i32) {
    %c0_i32 = arith.constant 0 : i32
    %c0_i32_0 = arith.constant 0 : i32
    %c0_i32_1 = arith.constant 0 : i32
    return %c0_i32, %c0_i32_0 : i32, i32
  }
  func.func @transform_4(%arg0: i32) -> (i32, i32) {
    %c0_i32 = arith.constant 0 : i32
    %c0_i32_0 = arith.constant 0 : i32
    %c0_i32_1 = arith.constant 0 : i32
    return %c0_i32, %c0_i32_0 : i32, i32
  }
  func.func @transform_5(%arg0: i32) -> (i32, i32) {
    %c0_i32 = arith.constant 0 : i32
    %c0_i32_0 = arith.constant 0 : i32
    %c0_i32_1 = arith.constant 0 : i32
    return %c0_i32, %c0_i32_0 : i32, i32
  }
  func.func @transform_6(%arg0: i32) -> (i32, i32) {
    %c0_i32 = arith.constant 0 : i32
    %c0_i32_0 = arith.constant 0 : i32
    %c0_i32_1 = arith.constant 0 : i32
    return %c0_i32, %c0_i32_0 : i32, i32
  }
  func.func @transform_7(%arg0: i32) -> (i32, i32) {
    %c0_i32 = arith.constant 0 : i32
    %c0_i32_0 = arith.constant 0 : i32
    %c0_i32_1 = arith.constant 0 : i32
    return %c0_i32, %c0_i32_0 : i32, i32
  }
  func.func @transform_8(%arg0: i32) -> (i32, i32) {
    %c0_i32 = arith.constant 0 : i32
    %c0_i32_0 = arith.constant 0 : i32
    %c0_i32_1 = arith.constant 0 : i32
    return %c0_i32, %c0_i32_0 : i32, i32
  }
  func.func @transform_9(%arg0: i32) -> (i32, i32) {
    %c0_i32 = arith.constant 0 : i32
    %c0_i32_0 = arith.constant 0 : i32
    %c0_i32_1 = arith.constant 0 : i32
    return %c0_i32, %c0_i32_0 : i32, i32
  }
  func.func @transform_10(%arg0: i32) -> (i32, i32) {
    %c0_i32 = arith.constant 0 : i32
    %c0_i32_0 = arith.constant 0 : i32
    %c0_i32_1 = arith.constant 0 : i32
    return %c0_i32, %c0_i32_0 : i32, i32
  }
  func.func @transform_11(%arg0: i32) -> (i32, i32) {
    %c0_i32 = arith.constant 0 : i32
    %c0_i32_0 = arith.constant 0 : i32
    %c0_i32_1 = arith.constant 0 : i32
    return %c0_i32, %c0_i32_0 : i32, i32
  }
}

</mosaic_0001>

<llo_original>
// kernel: transformer_encoder_layer.1
$region0: #{transformer_encoder_layer.1}
  #allocation0 [shape = 'u32[]', space=smem, size = 0x4, offset = 0x4, fixed_abs, tag = 'smem constant byte address 0x4 - core index']
  #allocation1 [shape = 'u32[72,128]{1,0:T(1,128)}', space=vmem, size = 0x9000, scoped, tag = 'internal scratch']
  %s0 = inlined_call_operand.vmem [shape: f32[16,64], index: 0, kind: input, shape index: {}]
  %s1 = inlined_call_operand.vmem [shape: bf16[64,192], index: 1, kind: input, shape index: {}]
  %s2 = inlined_call_operand.vmem [shape: f32[1,192], index: 2, kind: input, shape index: {}]
  %s3 = inlined_call_operand.vmem [shape: bf16[64,64], index: 3, kind: input, shape index: {}]
  %s4 = inlined_call_operand.vmem [shape: f32[1,64], index: 4, kind: input, shape index: {}]
  %s5 = inlined_call_operand.vmem [shape: f32[1,64], index: 5, kind: input, shape index: {}]
  %s6 = inlined_call_operand.vmem [shape: f32[1,64], index: 6, kind: input, shape index: {}]
  %s7 = inlined_call_operand.hbm [shape: bf16[64,128], index: 7, kind: input, shape index: {}]
  %s8 = inlined_call_operand.vmem [shape: f32[1,128], index: 8, kind: input, shape index: {}]
  %s9 = inlined_call_operand.vmem [shape: bf16[128,64], index: 9, kind: input, shape index: {}]
  %s10 = inlined_call_operand.vmem [shape: f32[1,64], index: 10, kind: input, shape index: {}]
  %s11 = inlined_call_operand.vmem [shape: f32[2,128], index: 11, kind: output, shape index: {}]
  %s12 = sld [smem:[#allocation0]]
  $region58: #{transformer_encoder_layer.1} parent=0
    _
  %s14 = ssub.s32 1, %s12
  %s15 = scalar_select 0, %s14, %s12
  $region1: #{transformer_encoder_layer.1} parent=0
    #allocation2 [shape = 'u8[16384]{0}', space=vmem, size = 0x4000, scoped, tag = 'input window, operand 7, single buffered']
    #allocation3 [shape = 's32[1]{0}', space=sflag, size = 0x4, scoped, tag = 'scoped memory for transformer_encoder_layer.1']
    %16 = vsyncpa [#allocation3], 0
    // Predicated region
    $region2: #{transformer_encoder_layer.1} parent=1 // pred_check
      _
    $region3: #{transformer_encoder_layer.1} parent=1 // pred_check_branch
      %18 = sbr.rel (0) target = $region5
    $region4: #{transformer_encoder_layer.1} parent=1 // pred_region
      _
    $region5: #{transformer_encoder_layer.1} parent=1 // pred_fallthru
      _
    // Predicated region
    $region6: #{transformer_encoder_layer.1} parent=1 // pred_check
      _
    $region7: #{transformer_encoder_layer.1} parent=1 // pred_check_branch
      %20 = sbr.rel (0) target = $region9
    $region8: #{transformer_encoder_layer.1} parent=1 // pred_region
      _
    $region9: #{transformer_encoder_layer.1} parent=1 // pred_fallthru
      _
    // Predicated region
    $region10: #{transformer_encoder_layer.1} parent=1 // pred_check
      _
    $region11: #{transformer_encoder_layer.1} parent=1 // pred_check_branch
      %22 = sbr.rel (0) target = $region13
    $region12: #{transformer_encoder_layer.1} parent=1 // pred_region
      _
    $region13: #{transformer_encoder_layer.1} parent=1 // pred_fallthru
      _
    // Predicated region
    $region14: #{transformer_encoder_layer.1} parent=1 // pred_check
      _
    $region15: #{transformer_encoder_layer.1} parent=1 // pred_check_branch
      %24 = sbr.rel (0) target = $region17
    $region16: #{transformer_encoder_layer.1} parent=1 // pred_region
      _
    $region17: #{transformer_encoder_layer.1} parent=1 // pred_fallthru
      _
    // Predicated region
    $region18: #{transformer_encoder_layer.1} parent=1 // pred_check
      _
    $region19: #{transformer_encoder_layer.1} parent=1 // pred_check_branch
      %26 = sbr.rel (0) target = $region21
    $region20: #{transformer_encoder_layer.1} parent=1 // pred_region
      _
    $region21: #{transformer_encoder_layer.1} parent=1 // pred_fallthru
      _
    // Predicated region
    $region22: #{transformer_encoder_layer.1} parent=1 // pred_check
      _
    $region23: #{transformer_encoder_layer.1} parent=1 // pred_check_branch
      %28 = sbr.rel (0) target = $region25
    $region24: #{transformer_encoder_layer.1} parent=1 // pred_region
      _
    $region25: #{transformer_encoder_layer.1} parent=1 // pred_fallthru
      _
    // Predicated region
    $region26: #{transformer_encoder_layer.1} parent=1 // pred_check
      _
    $region27: #{transformer_encoder_layer.1} parent=1 // pred_check_branch
      %30 = sbr.rel (0) target = $region29
    $region28: #{transformer_encoder_layer.1} parent=1 // pred_region
      _
    $region29: #{transformer_encoder_layer.1} parent=1 // pred_fallthru
      _
    // Predicated region
    $region30: #{transformer_encoder_layer.1} parent=1 // pred_check
      _
    $region31: #{transformer_encoder_layer.1} parent=1 // pred_check_branch
      %32 = sbr.rel (0) target = $region33
    $region32: #{transformer_encoder_layer.1} parent=1 // pred_region
      %34 = vsyncadd [#allocation3], 0
      %s35 = sshll.u32 %s7, 4
      %s36 = int_to_ptr.hbm [resolvable:$true] %s35
      %s37 = sshll.u32 [#allocation2], 4
      %s38 = int_to_ptr.vmem [resolvable:$true] %s37
      %43 = dma.hbm_to_vmem [thread:$0]  %s36, 512, %s38, [#allocation3], 64, 64, 4
    $region33: #{transformer_encoder_layer.1} parent=1 // pred_fallthru
      _
    // Predicated region
    $region34: #{transformer_encoder_layer.1} parent=1 // pred_check
      _
    $region35: #{transformer_encoder_layer.1} parent=1 // pred_check_branch
      %45 = sbr.rel (0) target = $region37
    $region36: #{transformer_encoder_layer.1} parent=1 // pred_region
      _
    $region37: #{transformer_encoder_layer.1} parent=1 // pred_fallthru
      _
    // Predicated region
    $region38: #{transformer_encoder_layer.1} parent=1 // pred_check
      _
    $region39: #{transformer_encoder_layer.1} parent=1 // pred_check_branch
      %47 = sbr.rel (0) target = $region41
    $region40: #{transformer_encoder_layer.1} parent=1 // pred_region
      _
    $region41: #{transformer_encoder_layer.1} parent=1 // pred_fallthru
      _
    // Predicated region
    $region42: #{transformer_encoder_layer.1} parent=1 // pred_check
      _
    $region43: #{transformer_encoder_layer.1} parent=1 // pred_check_branch
      %49 = sbr.rel (0) target = $region45
    $region44: #{transformer_encoder_layer.1} parent=1 // pred_region
      _
    $region45: #{transformer_encoder_layer.1} parent=1 // pred_fallthru
      _
    // Predicated region
    $region46: #{transformer_encoder_layer.1} parent=1 // pred_check
      _
    $region47: #{transformer_encoder_layer.1} parent=1 // pred_check_branch
      %51 = sbr.rel (0) target = $region49
    $region48: #{transformer_encoder_layer.1} parent=1 // pred_region
      %53 = dma.done [#allocation3], 512
    $region49: #{transformer_encoder_layer.1} parent=1 // pred_fallthru
      _
    %v55 = vld [vmem:[%s0] sm:$0xff]
    %v56 = vld [vmem:[%s0 + $0x8] sm:$0xff]
    %v57 = vpack.c.bf16 %v56, %v55
    %v58 = vld [vmem:[%s1] sm:$0xff]
    %v59 = vld [vmem:[%s1 + $0x8] sm:$0xff]
    %v60 = vld [vmem:[%s1 + $0x10] sm:$0xff]
    %v61 = vld [vmem:[%s1 + $0x18] sm:$0xff]
    %v62 = vld [vmem:[%s1 + $0x20] sm:$0xff]
    %v63 = vld [vmem:[%s1 + $0x28] sm:$0xff]
    %v64 = vld [vmem:[%s1 + $0x30] sm:$0xff]
    %v65 = vld [vmem:[%s1 + $0x38] sm:$0xff]
    %v66 = vld [vmem:[%s2] sm:$0x3]
    %v68 = vperm.slane %v66, 0
    %v69 = vperm.slane %v66, 1
    %v80 = vunpack.c.l.b16 %v58
    %v81 = vunpack.c.h.b16 %v58
    %v82 = vunpack.c.l.b16 %v59
    %v83 = vunpack.c.h.b16 %v59
    %v84 = vunpack.c.l.b16 %v60
    %v85 = vunpack.c.h.b16 %v60
    %v86 = vunpack.c.l.b16 %v61
    %v87 = vunpack.c.h.b16 %v61
    %v88 = vunpack.c.l.b16 %v62
    %v89 = vunpack.c.h.b16 %v62
    %v90 = vunpack.c.l.b16 %v63
    %v91 = vunpack.c.h.b16 %v63
    %v92 = vunpack.c.l.b16 %v64
    %v93 = vunpack.c.h.b16 %v64
    %v94 = vunpack.c.l.b16 %v65
    %v95 = vunpack.c.h.b16 %v65
    %v96 = vpack.c.b16 %v82, %v80
    %v97 = vpack.c.b16 %v83, %v81
    %v98 = vpack.c.b16 %v86, %v84
    %v99 = vpack.c.b16 %v87, %v85
    %v100 = vpack.c.b16 %v90, %v88
    %v101 = vpack.c.b16 %v91, %v89
    %v102 = vpack.c.b16 %v94, %v92
    %v103 = vpack.c.b16 %v95, %v93
    %vm112 = vcmask 523264
    %v114 = vsel %vm112, %v57, 0
    %116 = vmatpush.bf16.msra.mxu0 0
    %117 = vmatpush.bf16.msra.mxu0 0
    %118 = vmatpush.bf16.msra.mxu0 0
    %119 = vmatpush.bf16.msra.mxu0 0
    %120 = vmatpush.bf16.msra.mxu0 %v102
    %121 = vmatpush.bf16.msra.mxu0 %v100
    %122 = vmatpush.bf16.msra.mxu0 %v98
    %123 = vmatpush.bf16.msra.mxu0 %v96
    %124 = vmatmul.bf16.gmra.mxu0 %v114
    %v125 = vpop.f32.mrf.mxu0
    %v126 = vadd.f32 %v68, %v125
    %v127 = vpop.f32.mrf.mxu0
    %v128 = vadd.f32 %v68, %v127
    %129 = vdwg.mxu0
    %130 = vmatpush.bf16.msra.mxu0 0
    %131 = vmatpush.bf16.msra.mxu0 0
    %132 = vmatpush.bf16.msra.mxu0 0
    %133 = vmatpush.bf16.msra.mxu0 0
    %134 = vmatpush.bf16.msra.mxu0 %v103
    %135 = vmatpush.bf16.msra.mxu0 %v101
    %136 = vmatpush.bf16.msra.mxu0 %v99
    %137 = vmatpush.bf16.msra.mxu0 %v97
    %138 = vmatmul.bf16.gmra.mxu0 %v114
    %v139 = vpop.f32.mrf.mxu0
    %v140 = vadd.f32 %v69, %v139
    %v141 = vpop.f32.mrf.mxu0
    %v142 = vadd.f32 %v69, %v141
    %143 = vdwg.mxu0
    %v144 = vmul.f32 %v126, 0.25
    %v145 = vmul.f32 %v128, 0.25
    %v146 = vpack.c.bf16 %v144, %v144
    %v147 = vpack.c.bf16 %v145, %v145
    %v148 = vpack.c.bf16 %v126, %v126
    %v149 = vpack.c.bf16 %v128, %v128
    %v150 = vpack.c.bf16 %v140, %v140
    %v151 = vpack.c.bf16 %v142, %v142
    %v153 = vunpack.c.l.b16 %v148
    %v154 = vpack.c.b16 %v153, %v153
    %155 = vrot.lane.b32.xlu0 %v154, 64
    %v156 = vpop.permute.xlu0 %155
    %vm157 = vcmask 130048
    %v159 = vsel %vm157, %v146, 0
    %v162 = vsel %vm157, %v156, 0
    %164 = vmatpush.bf16.xpose.msra.mxu0 0
    %165 = vmatpush.bf16.xpose.msra.mxu0 0
    %166 = vmatpush.bf16.xpose.msra.mxu0 0
    %167 = vmatpush.bf16.xpose.msra.mxu0 0
    %168 = vmatpush.bf16.xpose.msra.mxu0 0
    %169 = vmatpush.bf16.xpose.msra.mxu0 0
    %170 = vmatpush.bf16.xpose.msra.mxu0 0
    %171 = vmatpush.bf16.xpose.msra.mxu0 %v162
    %172 = vmatmul.bf16.gmra.mxu0 %v159
    %v173 = vpop.f32.mrf.mxu0
    %v174 = vadd.f32 0.0, %v173
    %v175 = vpop.f32.mrf.mxu0
    %176 = vdwg.mxu0
    %v178 = vunpack.c.l.b16 %v149
    %v179 = vpack.c.b16 %v178, %v178
    %180 = vrot.lane.b32.xlu0 %v179, 64
    %v181 = vpop.permute.xlu0 %180
    %v183 = vsel %vm157, %v147, 0
    %v186 = vsel %vm157, %v181, 0
    %188 = vmatpush.bf16.xpose.msra.mxu0 0
    %189 = vmatpush.bf16.xpose.msra.mxu0 0
    %190 = vmatpush.bf16.xpose.msra.mxu0 0
    %191 = vmatpush.bf16.xpose.msra.mxu0 0
    %192 = vmatpush.bf16.xpose.msra.mxu0 0
    %193 = vmatpush.bf16.xpose.msra.mxu0 0
    %194 = vmatpush.bf16.xpose.msra.mxu0 0
    %195 = vmatpush.bf16.xpose.msra.mxu0 %v186
    %196 = vmatmul.bf16.gmra.mxu0 %v183
    %v197 = vpop.f32.mrf.mxu0
    %v198 = vadd.f32 0.0, %v197
    %v199 = vpop.f32.mrf.mxu0
    %200 = vdwg.mxu0
    %vm201 = vcmask 64512
    %v202 = vsel %vm201, %v174, -inf
    %203 = vmax.xlane.f32.xlu0 %v202
    %v204 = vpop.xlane.xlu0 %203
    %v205 = vsel %vm201, %v198, -inf
    %206 = vmax.xlane.f32.xlu0 %v205
    %v207 = vpop.xlane.xlu0 %206
    %v208 = vsub.f32 %v174, %v204
    %v209 = vsub.f32 %v198, %v207
    %v210 = vmul.f32 %v208, 1.442695
    %v211 = vpow.pop %v210
    %v212 = vmul.f32 %v209, 1.442695
    %v213 = vpow.pop %v212
    %v214 = vsel %vm201, %v211, 0.0
    %215 = vadd.xlane.f32.xlu0 %v214
    %v216 = vpop.xlane.xlu0 %215
    %v217 = vsel %vm201, %v213, 0.0
    %218 = vadd.xlane.f32.xlu0 %v217
    %v219 = vpop.xlane.xlu0 %218
    %v220 = vrcp.pop %v216
    %v221 = vrcp.pop %v219
    %v222 = vmul.f32 %v211, %v220
    %v223 = vmul.f32 %v213, %v221
    %v224 = vadd.f32 %v222, 0.0
    %v225 = vadd.f32 %v223, 0.0
    %v226 = vpack.c.bf16 %v222, %v222
    %v227 = vpack.c.bf16 %v223, %v223
    %v229 = vunpack.c.l.b16 %v226
    %v230 = vpack.c.b16 %v229, %v229
    %v232 = vshrl.u32 %v230, 16
    %v234 = vrot.slane %v232, 3
    %v236 = vsel %vm201, %v234, 0
    %vm238 = vcmask 1043456
    %v240 = vsel %vm238, %v150, 0
    %242 = vmatpush.bf16.msra.mxu0 0
    %243 = vmatpush.bf16.msra.mxu0 0
    %244 = vmatpush.bf16.msra.mxu0 0
    %245 = vmatpush.bf16.msra.mxu0 0
    %246 = vmatpush.bf16.msra.mxu0 0
    %247 = vmatpush.bf16.msra.mxu0 0
    %248 = vmatpush.bf16.msra.mxu0 0
    %249 = vmatpush.bf16.msra.mxu0 %v240
    %250 = vmatmul.bf16.gmra.mxu0 %v236
    %v251 = vpop.f32.mrf.mxu0
    %v252 = vadd.f32 0.0, %v251
    %v253 = vpop.f32.mrf.mxu0
    %254 = vdwg.mxu0
    %v256 = vunpack.c.l.b16 %v227
    %v257 = vpack.c.b16 %v256, %v256
    %v259 = vshrl.u32 %v257, 16
    %v261 = vrot.slane %v259, 3
    %v263 = vsel %vm201, %v261, 0
    %v266 = vsel %vm238, %v151, 0
    %268 = vmatpush.bf16.msra.mxu0 0
    %269 = vmatpush.bf16.msra.mxu0 0
    %270 = vmatpush.bf16.msra.mxu0 0
    %271 = vmatpush.bf16.msra.mxu0 0
    %272 = vmatpush.bf16.msra.mxu0 0
    %273 = vmatpush.bf16.msra.mxu0 0
    %274 = vmatpush.bf16.msra.mxu0 0
    %275 = vmatpush.bf16.msra.mxu0 %v266
    %276 = vmatmul.bf16.gmra.mxu0 %v263
    %v277 = vpop.f32.mrf.mxu0
    %v278 = vadd.f32 0.0, %v277
    %v279 = vpop.f32.mrf.mxu0
    %280 = vdwg.mxu0
    %v282 = vunpack.c.l.b16 %v146
    %v283 = vpack.c.b16 %v282, %v282
    %284 = vrot.lane.b32.xlu0 %v283, 112
    %v285 = vpop.permute.xlu0 %284
    %286 = vrot.lane.b32.xlu0 %v154, 48
    %v287 = vpop.permute.xlu0 %286
    %v289 = vsel %vm157, %v285, 0
    %v292 = vsel %vm157, %v287, 0
    %294 = vmatpush.bf16.xpose.msra.mxu0 0
    %295 = vmatpush.bf16.xpose.msra.mxu0 0
    %296 = vmatpush.bf16.xpose.msra.mxu0 0
    %297 = vmatpush.bf16.xpose.msra.mxu0 0
    %298 = vmatpush.bf16.xpose.msra.mxu0 0
    %299 = vmatpush.bf16.xpose.msra.mxu0 0
    %300 = vmatpush.bf16.xpose.msra.mxu0 0
    %301 = vmatpush.bf16.xpose.msra.mxu0 %v292
    %302 = vmatmul.bf16.gmra.mxu0 %v289
    %v303 = vpop.f32.mrf.mxu0
    %v304 = vadd.f32 0.0, %v303
    %v305 = vpop.f32.mrf.mxu0
    %306 = vdwg.mxu0
    %v308 = vunpack.c.l.b16 %v147
    %v309 = vpack.c.b16 %v308, %v308
    %310 = vrot.lane.b32.xlu0 %v309, 112
    %v311 = vpop.permute.xlu0 %310
    %312 = vrot.lane.b32.xlu0 %v179, 48
    %v313 = vpop.permute.xlu0 %312
    %v315 = vsel %vm157, %v311, 0
    %v318 = vsel %vm157, %v313, 0
    %320 = vmatpush.bf16.xpose.msra.mxu0 0
    %321 = vmatpush.bf16.xpose.msra.mxu0 0
    %322 = vmatpush.bf16.xpose.msra.mxu0 0
    %323 = vmatpush.bf16.xpose.msra.mxu0 0
    %324 = vmatpush.bf16.xpose.msra.mxu0 0
    %325 = vmatpush.bf16.xpose.msra.mxu0 0
    %326 = vmatpush.bf16.xpose.msra.mxu0 0
    %327 = vmatpush.bf16.xpose.msra.mxu0 %v318
    %328 = vmatmul.bf16.gmra.mxu0 %v315
    %v329 = vpop.f32.mrf.mxu0
    %v330 = vadd.f32 0.0, %v329
    %v331 = vpop.f32.mrf.mxu0
    %332 = vdwg.mxu0
    %v333 = vsel %vm201, %v304, -inf
    %334 = vmax.xlane.f32.xlu0 %v333
    %v335 = vpop.xlane.xlu0 %334
    %v336 = vsel %vm201, %v330, -inf
    %337 = vmax.xlane.f32.xlu0 %v336
    %v338 = vpop.xlane.xlu0 %337
    %v339 = vsub.f32 %v304, %v335
    %v340 = vsub.f32 %v330, %v338
    %v341 = vmul.f32 %v339, 1.442695
    %v342 = vpow.pop %v341
    %v343 = vmul.f32 %v340, 1.442695
    %v344 = vpow.pop %v343
    %v345 = vsel %vm201, %v342, 0.0
    %346 = vadd.xlane.f32.xlu0 %v345
    %v347 = vpop.xlane.xlu0 %346
    %v348 = vsel %vm201, %v344, 0.0
    %349 = vadd.xlane.f32.xlu0 %v348
    %v350 = vpop.xlane.xlu0 %349
    %v351 = vrcp.pop %v347
    %v352 = vrcp.pop %v350
    %v353 = vmul.f32 %v342, %v351
    %v354 = vmul.f32 %v344, %v352
    %v355 = vadd.f32 %v224, %v353
    %v356 = vadd.f32 %v225, %v354
    %v357 = vpack.c.bf16 %v353, %v353
    %v358 = vpack.c.bf16 %v354, %v354
    %v360 = vunpack.c.l.b16 %v357
    %v361 = vpack.c.b16 %v360, %v360
    %v363 = vshrl.u32 %v361, 16
    %v365 = vrot.slane %v363, 3
    %v367 = vunpack.c.l.b16 %v150
    %v368 = vpack.c.b16 %v367, %v367
    %369 = vrot.lane.b32.xlu0 %v368, 112
    %v370 = vpop.permute.xlu0 %369
    %v372 = vsel %vm201, %v365, 0
    %v375 = vsel %vm238, %v370, 0
    %377 = vmatpush.bf16.msra.mxu0 0
    %378 = vmatpush.bf16.msra.mxu0 0
    %379 = vmatpush.bf16.msra.mxu0 0
    %380 = vmatpush.bf16.msra.mxu0 0
    %381 = vmatpush.bf16.msra.mxu0 0
    %382 = vmatpush.bf16.msra.mxu0 0
    %383 = vmatpush.bf16.msra.mxu0 0
    %384 = vmatpush.bf16.msra.mxu0 %v375
    %385 = vmatmul.bf16.gmra.mxu0 %v372
    %v386 = vpop.f32.mrf.mxu0
    %v387 = vadd.f32 0.0, %v386
    %v388 = vpop.f32.mrf.mxu0
    %389 = vdwg.mxu0
    %v391 = vunpack.c.l.b16 %v358
    %v392 = vpack.c.b16 %v391, %v391
    %v394 = vshrl.u32 %v392, 16
    %v396 = vrot.slane %v394, 3
    %v398 = vunpack.c.l.b16 %v151
    %v399 = vpack.c.b16 %v398, %v398
    %400 = vrot.lane.b32.xlu0 %v399, 112
    %v401 = vpop.permute.xlu0 %400
    %v403 = vsel %vm201, %v396, 0
    %v406 = vsel %vm238, %v401, 0
    %408 = vmatpush.bf16.msra.mxu0 0
    %409 = vmatpush.bf16.msra.mxu0 0
    %410 = vmatpush.bf16.msra.mxu0 0
    %411 = vmatpush.bf16.msra.mxu0 0
    %412 = vmatpush.bf16.msra.mxu0 0
    %413 = vmatpush.bf16.msra.mxu0 0
    %414 = vmatpush.bf16.msra.mxu0 0
    %415 = vmatpush.bf16.msra.mxu0 %v406
    %416 = vmatmul.bf16.gmra.mxu0 %v403
    %v417 = vpop.f32.mrf.mxu0
    %v418 = vadd.f32 0.0, %v417
    %v419 = vpop.f32.mrf.mxu0
    %420 = vdwg.mxu0
    %421 = vrot.lane.b32.xlu0 %v283, 96
    %v422 = vpop.permute.xlu0 %421
    %423 = vrot.lane.b32.xlu0 %v154, 32
    %v424 = vpop.permute.xlu0 %423
    %v426 = vsel %vm157, %v422, 0
    %v429 = vsel %vm157, %v424, 0
    %431 = vmatpush.bf16.xpose.msra.mxu0 0
    %432 = vmatpush.bf16.xpose.msra.mxu0 0
    %433 = vmatpush.bf16.xpose.msra.mxu0 0
    %434 = vmatpush.bf16.xpose.msra.mxu0 0
    %435 = vmatpush.bf16.xpose.msra.mxu0 0
    %436 = vmatpush.bf16.xpose.msra.mxu0 0
    %437 = vmatpush.bf16.xpose.msra.mxu0 0
    %438 = vmatpush.bf16.xpose.msra.mxu0 %v429
    %439 = vmatmul.bf16.gmra.mxu0 %v426
    %v440 = vpop.f32.mrf.mxu0
    %v441 = vadd.f32 0.0, %v440
    %v442 = vpop.f32.mrf.mxu0
    %443 = vdwg.mxu0
    %444 = vrot.lane.b32.xlu0 %v309, 96
    %v445 = vpop.permute.xlu0 %444
    %446 = vrot.lane.b32.xlu0 %v179, 32
    %v447 = vpop.permute.xlu0 %446
    %v449 = vsel %vm157, %v445, 0
    %v452 = vsel %vm157, %v447, 0
    %454 = vmatpush.bf16.xpose.msra.mxu0 0
    %455 = vmatpush.bf16.xpose.msra.mxu0 0
    %456 = vmatpush.bf16.xpose.msra.mxu0 0
    %457 = vmatpush.bf16.xpose.msra.mxu0 0
    %458 = vmatpush.bf16.xpose.msra.mxu0 0
    %459 = vmatpush.bf16.xpose.msra.mxu0 0
    %460 = vmatpush.bf16.xpose.msra.mxu0 0
    %461 = vmatpush.bf16.xpose.msra.mxu0 %v452
    %462 = vmatmul.bf16.gmra.mxu0 %v449
    %v463 = vpop.f32.mrf.mxu0
    %v464 = vadd.f32 0.0, %v463
    %v465 = vpop.f32.mrf.mxu0
    %466 = vdwg.mxu0
    %v467 = vsel %vm201, %v441, -inf
    %468 = vmax.xlane.f32.xlu0 %v467
    %v469 = vpop.xlane.xlu0 %468
    %v470 = vsel %vm201, %v464, -inf
    %471 = vmax.xlane.f32.xlu0 %v470
    %v472 = vpop.xlane.xlu0 %471
    %v473 = vsub.f32 %v441, %v469
    %v474 = vsub.f32 %v464, %v472
    %v475 = vmul.f32 %v473, 1.442695
    %v476 = vpow.pop %v475
    %v477 = vmul.f32 %v474, 1.442695
    %v478 = vpow.pop %v477
    %v479 = vsel %vm201, %v476, 0.0
    %480 = vadd.xlane.f32.xlu0 %v479
    %v481 = vpop.xlane.xlu0 %480
    %v482 = vsel %vm201, %v478, 0.0
    %483 = vadd.xlane.f32.xlu0 %v482
    %v484 = vpop.xlane.xlu0 %483
    %v485 = vrcp.pop %v481
    %v486 = vrcp.pop %v484
    %v487 = vmul.f32 %v476, %v485
    %v488 = vmul.f32 %v478, %v486
    %v489 = vadd.f32 %v355, %v487
    %v490 = vadd.f32 %v356, %v488
    %v491 = vpack.c.bf16 %v487, %v487
    %v492 = vpack.c.bf16 %v488, %v488
    %v494 = vunpack.c.l.b16 %v491
    %v495 = vpack.c.b16 %v494, %v494
    %v497 = vshrl.u32 %v495, 16
    %v499 = vrot.slane %v497, 3
    %500 = vrot.lane.b32.xlu0 %v368, 96
    %v501 = vpop.permute.xlu0 %500
    %v503 = vsel %vm201, %v499, 0
    %v506 = vsel %vm238, %v501, 0
    %508 = vmatpush.bf16.msra.mxu0 0
    %509 = vmatpush.bf16.msra.mxu0 0
    %510 = vmatpush.bf16.msra.mxu0 0
    %511 = vmatpush.bf16.msra.mxu0 0
    %512 = vmatpush.bf16.msra.mxu0 0
    %513 = vmatpush.bf16.msra.mxu0 0
    %514 = vmatpush.bf16.msra.mxu0 0
    %515 = vmatpush.bf16.msra.mxu0 %v506
    %516 = vmatmul.bf16.gmra.mxu0 %v503
    %v517 = vpop.f32.mrf.mxu0
    %v518 = vadd.f32 0.0, %v517
    %v519 = vpop.f32.mrf.mxu0
    %520 = vdwg.mxu0
    %v522 = vunpack.c.l.b16 %v492
    %v523 = vpack.c.b16 %v522, %v522
    %v525 = vshrl.u32 %v523, 16
    %v527 = vrot.slane %v525, 3
    %528 = vrot.lane.b32.xlu0 %v399, 96
    %v529 = vpop.permute.xlu0 %528
    %v531 = vsel %vm201, %v527, 0
    %v534 = vsel %vm238, %v529, 0
    %536 = vmatpush.bf16.msra.mxu0 0
    %537 = vmatpush.bf16.msra.mxu0 0
    %538 = vmatpush.bf16.msra.mxu0 0
    %539 = vmatpush.bf16.msra.mxu0 0
    %540 = vmatpush.bf16.msra.mxu0 0
    %541 = vmatpush.bf16.msra.mxu0 0
    %542 = vmatpush.bf16.msra.mxu0 0
    %543 = vmatpush.bf16.msra.mxu0 %v534
    %544 = vmatmul.bf16.gmra.mxu0 %v531
    %v545 = vpop.f32.mrf.mxu0
    %v546 = vadd.f32 0.0, %v545
    %v547 = vpop.f32.mrf.mxu0
    %548 = vdwg.mxu0
    %549 = vrot.lane.b32.xlu0 %v283, 80
    %v550 = vpop.permute.xlu0 %549
    %551 = vrot.lane.b32.xlu0 %v154, 16
    %v552 = vpop.permute.xlu0 %551
    %v554 = vsel %vm157, %v550, 0
    %v557 = vsel %vm157, %v552, 0
    %559 = vmatpush.bf16.xpose.msra.mxu0 0
    %560 = vmatpush.bf16.xpose.msra.mxu0 0
    %561 = vmatpush.bf16.xpose.msra.mxu0 0
    %562 = vmatpush.bf16.xpose.msra.mxu0 0
    %563 = vmatpush.bf16.xpose.msra.mxu0 0
    %564 = vmatpush.bf16.xpose.msra.mxu0 0
    %565 = vmatpush.bf16.xpose.msra.mxu0 0
    %566 = vmatpush.bf16.xpose.msra.mxu0 %v557
    %567 = vmatmul.bf16.gmra.mxu0 %v554
    %v568 = vpop.f32.mrf.mxu0
    %v569 = vadd.f32 0.0, %v568
    %v570 = vpop.f32.mrf.mxu0
    %571 = vdwg.mxu0
    %572 = vrot.lane.b32.xlu0 %v309, 80
    %v573 = vpop.permute.xlu0 %572
    %574 = vrot.lane.b32.xlu0 %v179, 16
    %v575 = vpop.permute.xlu0 %574
    %v577 = vsel %vm157, %v573, 0
    %v580 = vsel %vm157, %v575, 0
    %582 = vmatpush.bf16.xpose.msra.mxu0 0
    %583 = vmatpush.bf16.xpose.msra.mxu0 0
    %584 = vmatpush.bf16.xpose.msra.mxu0 0
    %585 = vmatpush.bf16.xpose.msra.mxu0 0
    %586 = vmatpush.bf16.xpose.msra.mxu0 0
    %587 = vmatpush.bf16.xpose.msra.mxu0 0
    %588 = vmatpush.bf16.xpose.msra.mxu0 0
    %589 = vmatpush.bf16.xpose.msra.mxu0 %v580
    %590 = vmatmul.bf16.gmra.mxu0 %v577
    %v591 = vpop.f32.mrf.mxu0
    %v592 = vadd.f32 0.0, %v591
    %v593 = vpop.f32.mrf.mxu0
    %594 = vdwg.mxu0
    %v595 = vsel %vm201, %v569, -inf
    %596 = vmax.xlane.f32.xlu0 %v595
    %v597 = vpop.xlane.xlu0 %596
    %v598 = vsel %vm201, %v592, -inf
    %599 = vmax.xlane.f32.xlu0 %v598
    %v600 = vpop.xlane.xlu0 %599
    %v601 = vsub.f32 %v569, %v597
    %v602 = vsub.f32 %v592, %v600
    %v603 = vmul.f32 %v601, 1.442695
    %v604 = vpow.pop %v603
    %v605 = vmul.f32 %v602, 1.442695
    %v606 = vpow.pop %v605
    %v607 = vsel %vm201, %v604, 0.0
    %608 = vadd.xlane.f32.xlu0 %v607
    %v609 = vpop.xlane.xlu0 %608
    %v610 = vsel %vm201, %v606, 0.0
    %611 = vadd.xlane.f32.xlu0 %v610
    %v612 = vpop.xlane.xlu0 %611
    %v613 = vrcp.pop %v609
    %v614 = vrcp.pop %v612
    %v615 = vmul.f32 %v604, %v613
    %v616 = vmul.f32 %v606, %v614
    %v617 = vadd.f32 %v489, %v615
    %v618 = vadd.f32 %v490, %v616
    %v619 = vpack.c.bf16 %v615, %v615
    %v620 = vpack.c.bf16 %v616, %v616
    %v622 = vunpack.c.l.b16 %v619
    %v623 = vpack.c.b16 %v622, %v622
    %v625 = vshrl.u32 %v623, 16
    %v627 = vrot.slane %v625, 3
    %628 = vrot.lane.b32.xlu0 %v368, 80
    %v629 = vpop.permute.xlu0 %628
    %v631 = vsel %vm201, %v627, 0
    %v634 = vsel %vm238, %v629, 0
    %636 = vmatpush.bf16.msra.mxu0 0
    %637 = vmatpush.bf16.msra.mxu0 0
    %638 = vmatpush.bf16.msra.mxu0 0
    %639 = vmatpush.bf16.msra.mxu0 0
    %640 = vmatpush.bf16.msra.mxu0 0
    %641 = vmatpush.bf16.msra.mxu0 0
    %642 = vmatpush.bf16.msra.mxu0 0
    %643 = vmatpush.bf16.msra.mxu0 %v634
    %644 = vmatmul.bf16.gmra.mxu0 %v631
    %v645 = vpop.f32.mrf.mxu0
    %v646 = vadd.f32 0.0, %v645
    %v647 = vpop.f32.mrf.mxu0
    %648 = vdwg.mxu0
    %v650 = vunpack.c.l.b16 %v620
    %v651 = vpack.c.b16 %v650, %v650
    %v653 = vshrl.u32 %v651, 16
    %v655 = vrot.slane %v653, 3
    %656 = vrot.lane.b32.xlu0 %v399, 80
    %v657 = vpop.permute.xlu0 %656
    %v659 = vsel %vm201, %v655, 0
    %v662 = vsel %vm238, %v657, 0
    %664 = vmatpush.bf16.msra.mxu0 0
    %665 = vmatpush.bf16.msra.mxu0 0
    %666 = vmatpush.bf16.msra.mxu0 0
    %667 = vmatpush.bf16.msra.mxu0 0
    %668 = vmatpush.bf16.msra.mxu0 0
    %669 = vmatpush.bf16.msra.mxu0 0
    %670 = vmatpush.bf16.msra.mxu0 0
    %671 = vmatpush.bf16.msra.mxu0 %v662
    %672 = vmatmul.bf16.gmra.mxu0 %v659
    %v673 = vpop.f32.mrf.mxu0
    %v674 = vadd.f32 0.0, %v673
    %v675 = vpop.f32.mrf.mxu0
    %676 = vdwg.mxu0
    %v679 = vrot.slane %v278, 7
    %vm680 = vcmask 1041409
    %v681 = vsel %vm680, %v679, %v252
    %v685 = vrot.slane %v418, 7
    %v686 = vsel %vm680, %v685, %v387
    %687 = vrot.lane.b32.xlu0 %v686, 16
    %v688 = vpop.permute.xlu0 %687
    %v692 = vrot.slane %v546, 7
    %v693 = vsel %vm680, %v692, %v518
    %694 = vrot.lane.b32.xlu0 %v693, 32
    %v695 = vpop.permute.xlu0 %694
    %v699 = vrot.slane %v674, 7
    %v700 = vsel %vm680, %v699, %v646
    %701 = vrot.lane.b32.xlu0 %v700, 48
    %v702 = vpop.permute.xlu0 %701
    %v704 = vsel %vm157, %v681, %v688
    %vm705 = vcmask 261120
    %v706 = vsel %vm705, %v704, %v695
    %vm707 = vcmask 392192
    %v708 = vsel %vm707, %v706, %v702
    %v709 = vpack.c.bf16 %v708, %v708
    %v710 = vld [vmem:[%s3] sm:$0xf]
    %v711 = vld [vmem:[%s3 + $0x4] sm:$0xf]
    %v712 = vld [vmem:[%s3 + $0x8] sm:$0xf]
    %v713 = vld [vmem:[%s3 + $0xc] sm:$0xf]
    %v714 = vld [vmem:[%s3 + $0x10] sm:$0xf]
    %v715 = vld [vmem:[%s3 + $0x14] sm:$0xf]
    %v716 = vld [vmem:[%s3 + $0x18] sm:$0xf]
    %v717 = vld [vmem:[%s3 + $0x1c] sm:$0xf]
    %v718 = vld [vmem:[%s4] sm:$0x1]
    %v720 = vperm.slane %v718, 0
    %v730 = vunpack.c.l.b16 %v710
    %v731 = vunpack.c.l.b16 %v711
    %v732 = vunpack.c.l.b16 %v712
    %v733 = vunpack.c.l.b16 %v713
    %v734 = vunpack.c.l.b16 %v714
    %v735 = vunpack.c.l.b16 %v715
    %v736 = vunpack.c.l.b16 %v716
    %v737 = vunpack.c.l.b16 %v717
    %v738 = vpack.c.b16 %v731, %v730
    %v739 = vpack.c.b16 %v733, %v732
    %v740 = vpack.c.b16 %v735, %v734
    %v741 = vpack.c.b16 %v737, %v736
    %v747 = vsel %vm112, %v709, 0
    %749 = vmatpush.bf16.msra.mxu0 0
    %750 = vmatpush.bf16.msra.mxu0 0
    %751 = vmatpush.bf16.msra.mxu0 0
    %752 = vmatpush.bf16.msra.mxu0 0
    %753 = vmatpush.bf16.msra.mxu0 %v741
    %754 = vmatpush.bf16.msra.mxu0 %v740
    %755 = vmatpush.bf16.msra.mxu0 %v739
    %756 = vmatpush.bf16.msra.mxu0 %v738
    %757 = vmatmul.bf16.gmra.mxu0 %v747
    %v758 = vpop.f32.mrf.mxu0
    %v759 = vadd.f32 %v720, %v758
    %v760 = vpop.f32.mrf.mxu0
    %761 = vdwg.mxu0
    %s762 = scalar_lea.vmem %s0, 7
    %v763 = vld [vmem:[%s762] ss:$8 sm:$0x3]
    %v764 = vadd.f32 %v763, %v759
    %vm765 = vcmask 517120
    %v766 = vsel %vm765, %v764, 0.0
    %767 = vadd.xlane.f32.xlu0 %v766
    %v768 = vpop.xlane.xlu0 %767
    %v769 = vrcp.pop 64.0
    %v770 = vmul.f32 64.0, %v769
    %v771 = vsub.f32 1.0, %v770
    %v772 = vmul.f32 %v769, %v771
    %v773 = vadd.f32 %v769, %v772
    %vm774 = vweird.f32 %v769
    %v775 = vsel %vm774, %v769, %v773
    %v776 = vmul.f32 %v768, %v775
    %v777 = vsub.f32 %v764, %v776
    %v778 = vmul.f32 %v777, %v777
    %v779 = vsel %vm765, %v778, 0.0
    %780 = vadd.xlane.f32.xlu0 %v779
    %v781 = vpop.xlane.xlu0 %780
    %v782 = vmul.f32 %v781, %v775
    %v783 = vadd.f32 %v782, 1e-05
    %v784 = vrsqrt.pop %v783
    %v785 = vmul.f32 %v784, %v783
    %v786 = vmul.f32 %v785, %v784
    %v787 = vmul.f32 0.5, %v786
    %v788 = vsub.f32 1.5, %v787
    %v789 = vmul.f32 %v784, %v788
    %vm790 = vweird.f32 %v783
    %vm791 = vweird.f32 %v784
    %vm792 = vmor %vm790, %vm791
    %v793 = vsel %vm792, %v784, %v789
    %v794 = vmul.f32 %v777, %v793
    %v795 = vld [vmem:[%s5] sm:$0x1]
    %v797 = vperm.slane %v795, 0
    %v799 = vmul.f32 %v794, %v797
    %v800 = vld [vmem:[%s6] sm:$0x1]
    %v802 = vperm.slane %v800, 0
    %v804 = vadd.f32 %v799, %v802
    %v805 = vpack.c.bf16 %v804, %v804
    %v806 = vld [vmem:[#allocation2] sm:$0xf]
    %v807 = vld [vmem:[#allocation2 + $0x4] sm:$0xf]
    %v808 = vld [vmem:[#allocation2 + $0x8] sm:$0xf]
    %v809 = vld [vmem:[#allocation2 + $0xc] sm:$0xf]
    %v810 = vld [vmem:[#allocation2 + $0x10] sm:$0xf]
    %v811 = vld [vmem:[#allocation2 + $0x14] sm:$0xf]
    %v812 = vld [vmem:[#allocation2 + $0x18] sm:$0xf]
    %v813 = vld [vmem:[#allocation2 + $0x1c] sm:$0xf]
    %v814 = vld [vmem:[%s8] sm:$0x1]
    %v816 = vperm.slane %v814, 0
    %v826 = vunpack.c.l.b16 %v806
    %v827 = vunpack.c.l.b16 %v807
    %v828 = vunpack.c.l.b16 %v808
    %v829 = vunpack.c.l.b16 %v809
    %v830 = vunpack.c.l.b16 %v810
    %v831 = vunpack.c.l.b16 %v811
    %v832 = vunpack.c.l.b16 %v812
    %v833 = vunpack.c.l.b16 %v813
    %v834 = vpack.c.b16 %v827, %v826
    %v835 = vpack.c.b16 %v829, %v828
    %v836 = vpack.c.b16 %v831, %v830
    %v837 = vpack.c.b16 %v833, %v832
    %v843 = vsel %vm112, %v805, 0
    %845 = vmatpush.bf16.msra.mxu0 0
    %846 = vmatpush.bf16.msra.mxu0 0
    %847 = vmatpush.bf16.msra.mxu0 0
    %848 = vmatpush.bf16.msra.mxu0 0
    %849 = vmatpush.bf16.msra.mxu0 %v837
    %850 = vmatpush.bf16.msra.mxu0 %v836
    %851 = vmatpush.bf16.msra.mxu0 %v835
    %852 = vmatpush.bf16.msra.mxu0 %v834
    %853 = vmatmul.bf16.gmra.mxu0 %v843
    %v854 = vpop.f32.mrf.mxu0
    %v855 = vadd.f32 %v816, %v854
    %v856 = vpop.f32.mrf.mxu0
    %857 = vdwg.mxu0
    %v858 = vmax.f32 %v855, 0.0
    %v859 = vpack.c.bf16 %v858, %v858
    %v860 = vld [vmem:[%s9] sm:$0xf]
    %v861 = vld [vmem:[%s9 + $0x4] sm:$0xf]
    %v862 = vld [vmem:[%s9 + $0x8] sm:$0xf]
    %v863 = vld [vmem:[%s9 + $0xc] sm:$0xf]
    %v864 = vld [vmem:[%s9 + $0x10] sm:$0xf]
    %v865 = vld [vmem:[%s9 + $0x14] sm:$0xf]
    %v866 = vld [vmem:[%s9 + $0x18] sm:$0xf]
    %v867 = vld [vmem:[%s9 + $0x1c] sm:$0xf]
    %v868 = vld [vmem:[%s9 + $0x20] sm:$0xf]
    %v869 = vld [vmem:[%s9 + $0x24] sm:$0xf]
    %v870 = vld [vmem:[%s9 + $0x28] sm:$0xf]
    %v871 = vld [vmem:[%s9 + $0x2c] sm:$0xf]
    %v872 = vld [vmem:[%s9 + $0x30] sm:$0xf]
    %v873 = vld [vmem:[%s9 + $0x34] sm:$0xf]
    %v874 = vld [vmem:[%s9 + $0x38] sm:$0xf]
    %v875 = vld [vmem:[%s9 + $0x3c] sm:$0xf]
    %v876 = vld [vmem:[%s10] sm:$0x1]
    %v878 = vperm.slane %v876, 0
    %v896 = vunpack.c.l.b16 %v860
    %v897 = vunpack.c.l.b16 %v861
    %v898 = vunpack.c.l.b16 %v862
    %v899 = vunpack.c.l.b16 %v863
    %v900 = vunpack.c.l.b16 %v864
    %v901 = vunpack.c.l.b16 %v865
    %v902 = vunpack.c.l.b16 %v866
    %v903 = vunpack.c.l.b16 %v867
    %v904 = vunpack.c.l.b16 %v868
    %v905 = vunpack.c.l.b16 %v869
    %v906 = vunpack.c.l.b16 %v870
    %v907 = vunpack.c.l.b16 %v871
    %v908 = vunpack.c.l.b16 %v872
    %v909 = vunpack.c.l.b16 %v873
    %v910 = vunpack.c.l.b16 %v874
    %v911 = vunpack.c.l.b16 %v875
    %v912 = vpack.c.b16 %v897, %v896
    %v913 = vpack.c.b16 %v899, %v898
    %v914 = vpack.c.b16 %v901, %v900
    %v915 = vpack.c.b16 %v903, %v902
    %v916 = vpack.c.b16 %v905, %v904
    %v917 = vpack.c.b16 %v907, %v906
    %v918 = vpack.c.b16 %v909, %v908
    %v919 = vpack.c.b16 %v911, %v910
    %928 = vmatpush.bf16.msra.mxu0 %v919
    %929 = vmatpush.bf16.msra.mxu0 %v918
    %930 = vmatpush.bf16.msra.mxu0 %v917
    %931 = vmatpush.bf16.msra.mxu0 %v916
    %932 = vmatpush.bf16.msra.mxu0 %v915
    %933 = vmatpush.bf16.msra.mxu0 %v914
    %934 = vmatpush.bf16.msra.mxu0 %v913
    %935 = vmatpush.bf16.msra.mxu0 %v912
    %936 = vmatmul.bf16.gmra.mxu0 %v859
    %v937 = vpop.f32.mrf.mxu0
    %v938 = vadd.f32 %v878, %v937
    %v939 = vpop.f32.mrf.mxu0
    %940 = vdwg.mxu0
    %v941 = vadd.f32 %v804, %v938
    %v944 = vrot.slane %v618, 7
    %v945 = vsel %vm680, %v944, %v617
    %v947 = vrot.slane %v617, 1
    %v948 = vsel %vm680, %v618, %v947
    %949 = vrot.lane.b32.xlu0 %v948, 8
    %v950 = vpop.permute.xlu0 %949
    %v952 = vrot.slane %v617, 2
    %v953 = vrot.slane %v618, 1
    %v954 = vsel %vm680, %v953, %v952
    %955 = vrot.lane.b32.xlu0 %v954, 16
    %v956 = vpop.permute.xlu0 %955
    %v958 = vrot.slane %v617, 3
    %v959 = vrot.slane %v618, 2
    %v960 = vsel %vm680, %v959, %v958
    %961 = vrot.lane.b32.xlu0 %v960, 24
    %v962 = vpop.permute.xlu0 %961
    %v964 = vrot.slane %v617, 4
    %v965 = vrot.slane %v618, 3
    %v966 = vsel %vm680, %v965, %v964
    %967 = vrot.lane.b32.xlu0 %v966, 32
    %v968 = vpop.permute.xlu0 %967
    %v970 = vrot.slane %v617, 5
    %v971 = vrot.slane %v618, 4
    %v972 = vsel %vm680, %v971, %v970
    %973 = vrot.lane.b32.xlu0 %v972, 40
    %v974 = vpop.permute.xlu0 %973
    %v976 = vrot.slane %v617, 6
    %v977 = vrot.slane %v618, 5
    %v978 = vsel %vm680, %v977, %v976
    %979 = vrot.lane.b32.xlu0 %v978, 48
    %v980 = vpop.permute.xlu0 %979
    %v982 = vrot.slane %v617, 7
    %v983 = vrot.slane %v618, 6
    %v984 = vsel %vm680, %v983, %v982
    %985 = vrot.lane.b32.xlu0 %v984, 56
    %v986 = vpop.permute.xlu0 %985
    %v988 = vsel %vm201, %v945, %v950
    %v989 = vsel %vm157, %v988, %v956
    %vm990 = vcmask 195584
    %v991 = vsel %vm990, %v989, %v962
    %v992 = vsel %vm705, %v991, %v968
    %vm993 = vcmask 326656
    %v994 = vsel %vm993, %v992, %v974
    %v995 = vsel %vm707, %v994, %v980
    %vm996 = vcmask 457728
    %v997 = vsel %vm996, %v995, %v986
    %v998 = vmul.f32 %v997, 0.25
    %1000 = vrot.lane.b32.xlu0 %v998, 64
    %v1001 = vpop.permute.xlu0 %1000
    %v1003 = vsel %vm112, %v941, %v1001
    %1004 = vst [vmem:[%s11] sm:$0x3] %v1003
    // Predicated region
    $region50: #{transformer_encoder_layer.1} parent=1 // pred_check
      _
    $region51: #{transformer_encoder_layer.1} parent=1 // pred_check_branch
      %1006 = sbr.rel (0) target = $region53
    $region52: #{transformer_encoder_layer.1} parent=1 // pred_region
      _
    $region53: #{transformer_encoder_layer.1} parent=1 // pred_fallthru
      _
    // Predicated region
    $region54: #{transformer_encoder_layer.1} parent=1 // pred_check
      _
    $region55: #{transformer_encoder_layer.1} parent=1 // pred_check_branch
      %1008 = sbr.rel (0) target = $region57
    $region56: #{transformer_encoder_layer.1} parent=1 // pred_region
      _
    $region57: #{transformer_encoder_layer.1} parent=1 // pred_fallthru
      _
    %1009 = vsyncpa [#allocation3], 1

</llo_original>
